<compile_context>
chip_gen: v7x
topology: tpu7x:2x2x1
jax: 0.10.0
libtpu: 0.0.40
codegen_flags: <defaults>
</compile_context>

<pallas_src>
import functools
import math

import jax
import jax.numpy as jnp
from jax import lax
from jax.experimental import pallas as pl
from jax.experimental.pallas import tpu as pltpu

FEAT_NUM = 128     # feat_num argument of FaceNet
CLS_NUM = 25       # fixed by Arcsoftmax(feature_num, 25)
CLS_PAD = 128      # class dim padded to a full lane group (lane-dense stores)
HID = 1000         # BatchNorm1d / Linear hidden width in the PyTorch module
HID_PAD = 1024     # padded to 8*128 for fully lane-dense vregs / MXU K tiles
BN_EPS = 1e-5
NORM_EPS = 1e-12
S_PARAM = 1.0      # FaceNet.forward calls arc_softmax(feature, 1, 1)
M_PARAM = 1.0
COS_M = math.cos(M_PARAM)
SIN_M = math.sin(M_PARAM)
SCALE = S_PARAM * 10.0


def facenet_kernel(x_ref, wbb_ref, gamma_ref, beta_ref, wlin_ref, warc_ref,
                   feat_ref, arc_ref, *, real_b):
    # ---- backbone stand-in (see TODO(synk) above): GAP + Linear(C -> HID_PAD)
    # x arrives lane-dense as (B_pad, C, H*W): one dense lane reduce.
    pooled = jnp.mean(x_ref[...], axis=-1)                                   # (B_pad, C) f32
    y = jnp.dot(pooled.astype(jnp.bfloat16), wbb_ref[...],
                preferred_element_type=jnp.float32)                          # (B_pad, HID_PAD)

    # ---- feature_net: BatchNorm1d (training-mode batch stats over the REAL
    #      batch rows only) + LeakyReLU(0.1) + Linear(HID, F, bias=False).
    # Padded batch rows of x are zero -> their y rows are exactly zero, so the
    # column sums already only see the real rows; the diff still needs a row
    # mask because (0 - mean) is nonzero on padded rows.
    b_pad = y.shape[0]
    row_mask = (lax.broadcasted_iota(jnp.int32, (b_pad, 1), 0)
                < real_b).astype(jnp.float32)
    inv_b = 1.0 / float(real_b)
    mean = jnp.sum(y, axis=0, keepdims=True) * inv_b                         # (1, HID_PAD)
    diff = (y - mean) * row_mask
    var = jnp.sum(diff * diff, axis=0, keepdims=True) * inv_b                # biased var
    h = diff * lax.rsqrt(var + BN_EPS)                                       # EUP rsqrt
    h = h * gamma_ref[...] + beta_ref[...]
    h = jnp.where(h >= 0.0, h, 0.1 * h)                                      # LeakyReLU(0.1)
    feature = jnp.dot(h.astype(jnp.bfloat16), wlin_ref[...],
                      preferred_element_type=jnp.float32)                    # (B_pad, F)
    feat_ref[...] = feature.astype(feat_ref.dtype)

    # ---- Arcsoftmax(feature, s=1, m=1)
    # warc_ref = F.normalize(w, dim=0) * 0.1, zero-padded to CLS_PAD columns
    # (prepared once in init_params), so `cosa` is exactly
    # matmul(x_norm, w_norm) / 10 of the original code.  The acos/sin identity
    # is intentionally applied to this /10-scaled cosine — mirrors FaceNet.
    sumsq = jnp.sum(feature * feature, axis=1, keepdims=True)
    x_norm = feature * lax.rsqrt(jnp.maximum(sumsq, NORM_EPS * NORM_EPS))    # F.normalize(x, dim=1)

    cosa = jnp.dot(x_norm.astype(jnp.bfloat16), warc_ref[...],
                   preferred_element_type=jnp.float32)                       # (B_pad, CLS_PAD)
    # cos(acos(c) + m) = c*cos(m) - sqrt(1-c^2)*sin(m)   (acos in [0, pi] => sin >= 0)
    sin_a = jnp.sqrt(jnp.maximum(1.0 - cosa * cosa, 0.0))
    cos_am = cosa * COS_M - sin_a * SIN_M

    e_am = jnp.exp(SCALE * cos_am)
    e_a = jnp.exp(SCALE * cosa)
    # Mask the zero-padded class columns out of the softmax denominator.
    cls_mask = lax.broadcasted_iota(jnp.int32, (1, CLS_PAD), 1) < CLS_NUM
    e_a_sum = jnp.sum(jnp.where(cls_mask, e_a, 0.0), axis=1, keepdims=True)
    denom = e_a_sum - e_a + e_am
    arc_ref[...] = (e_am / denom).astype(arc_ref.dtype)                      # exact divide


def facenet_forward(x, params):
    B, C, H, W = x.shape
    b_pad = max(8, pl.cdiv(B, 8) * 8)                 # sublane-dense batch
    x3d = x.reshape(B, C, H * W)                      # lane-dense GAP layout
    if b_pad != B:
        x3d = jnp.pad(x3d, ((0, b_pad - B), (0, 0), (0, 0)))

    vmem = pl.BlockSpec(memory_space=pltpu.MemorySpace.VMEM)
    out_shape = (jax.ShapeDtypeStruct((b_pad, FEAT_NUM), jnp.float32),
                 jax.ShapeDtypeStruct((b_pad, CLS_PAD), jnp.float32))
    kernel = functools.partial(facenet_kernel, real_b=B)
    feature, arc_padded = pl.pallas_call(
        kernel,
        out_shape=out_shape,
        in_specs=[vmem] * 6,
        out_specs=(vmem, vmem),
    )(x3d, params["w_bb"], params["gamma"], params["beta"],
      params["w_lin_t"], params["w_arc"])
    return feature[:B], arc_padded[:B, :CLS_NUM]


def init_params(key, c_in):
    k1, k2, k3 = jax.random.split(key, 3)
    # Backbone stand-in projection C -> 1000 (TODO(synk): replaces densenet121).
    w_bb = 0.1 * jax.random.normal(k1, (c_in, HID), jnp.float32)
    # BatchNorm1d(1000): default init gamma=1, beta=0.
    gamma = jnp.ones((1, HID), jnp.float32)
    beta = jnp.zeros((1, HID), jnp.float32)
    # Linear(1000, feat_num, bias=False): transposed weight (1000, F).
    w_lin_t = jax.random.normal(k2, (HID, FEAT_NUM), jnp.float32) / jnp.sqrt(1000.0)
    # Arcsoftmax.w = randn(feature_num, cls_num)
    w_arc = jax.random.normal(k3, (FEAT_NUM, CLS_NUM), jnp.float32)

    # ---- one-time, cached kernel-ready preparation (hoisted out of the
    #      per-call path):
    # hidden dim zero-padded 1000 -> 1024 (zero gamma/beta/w_lin rows keep the
    # real-feature math bit-identical), Arcsoftmax weight normalized
    # (F.normalize(w, dim=0)), /10 quirk folded in, classes zero-padded to
    # CLS_PAD, and the matmul weights cast to bf16 (f32 accumulation kept via
    # preferred_element_type inside the kernel).
    pad_h = HID_PAD - HID
    w_bb_p = jnp.pad(w_bb, ((0, 0), (0, pad_h))).astype(jnp.bfloat16)
    gamma_p = jnp.pad(gamma, ((0, 0), (0, pad_h)))
    beta_p = jnp.pad(beta, ((0, 0), (0, pad_h)))
    w_lin_t_p = jnp.pad(w_lin_t, ((0, pad_h), (0, 0))).astype(jnp.bfloat16)

    w_nrm = jnp.sqrt(jnp.sum(w_arc * w_arc, axis=0, keepdims=True))
    w_norm = w_arc / jnp.maximum(w_nrm, NORM_EPS)
    w_arc_p = jnp.pad(w_norm * 0.1,
                      ((0, 0), (0, CLS_PAD - CLS_NUM))).astype(jnp.bfloat16)

    return dict(w_bb=w_bb_p, gamma=gamma_p, beta=beta_p,
                w_lin_t=w_lin_t_p, w_arc=w_arc_p)


if __name__ == "__main__":
    B, C, H, W = 2, 4, 16, 16
    key = jax.random.PRNGKey(0)
    kx, kp = jax.random.split(key)
    x = jax.random.normal(kx, (B, C, H, W), jnp.float32)
    params = init_params(kp, C)

    fwd = jax.jit(facenet_forward)
    feature, arcsoftmax = jax.block_until_ready(fwd(x, params))

    assert feature.shape == (B, FEAT_NUM) and arcsoftmax.shape == (B, CLS_NUM)
    assert bool(jnp.all(jnp.isfinite(feature))) and bool(jnp.all(jnp.isfinite(arcsoftmax)))
    print("KERNEL_OK")
</pallas_src>

<mosaic_0001>
module attributes {stable_mosaic.version = 11 : i64} {
  func.func @facenet_kernel(%arg0: memref<8x4x256xf32, #tpu.memory_space<vmem>>, %arg1: memref<4x1024xbf16, #tpu.memory_space<vmem>>, %arg2: memref<1x1024xf32, #tpu.memory_space<vmem>>, %arg3: memref<1x1024xf32, #tpu.memory_space<vmem>>, %arg4: memref<1024x128xbf16, #tpu.memory_space<vmem>>, %arg5: memref<128x128xbf16, #tpu.memory_space<vmem>>, %arg6: memref<8x128xf32, #tpu.memory_space<vmem>>, %arg7: memref<8x128xf32, #tpu.memory_space<vmem>>) attributes {dimension_semantics = [], scalar_prefetch = 0 : i64, scratch_operands = 0 : i64, tpu.core_type = #tpu.core_type<tc>} {
    %c0 = arith.constant 0 : index
    %c0_0 = arith.constant 0 : index
    %c0_1 = arith.constant 0 : index
    %0 = vector.load %arg0[%c0, %c0_0, %c0_1] : memref<8x4x256xf32, #tpu.memory_space<vmem>>, vector<8x4x256xf32>
    %cst = arith.constant dense<0.000000e+00> : vector<8x4xf32>
    %1 = vector.multi_reduction <add>, %0, %cst [2] : vector<8x4x256xf32> to vector<8x4xf32>
    %cst_2 = arith.constant 2.560000e+02 : f32
    %2 = vector.broadcast %cst_2 : f32 to vector<8x4xf32>
    %3 = arith.divf %1, %2 : vector<8x4xf32>
    %4 = arith.truncf %3 : vector<8x4xf32> to vector<8x4xbf16>
    %c0_3 = arith.constant 0 : index
    %c0_4 = arith.constant 0 : index
    %5 = vector.load %arg1[%c0_3, %c0_4] : memref<4x1024xbf16, #tpu.memory_space<vmem>>, vector<4x1024xbf16>
    %cst_5 = arith.constant dense<0.000000e+00> : vector<8x1024xf32>
    %6 = tpu.matmul %4, %5, %cst_5 {dimension_numbers = #tpu.dot_dimension_numbers<[1], [0], [0], [1], [0, 0, 1, 1], [], []>} : vector<8x4xbf16>, vector<4x1024xbf16>, vector<8x1024xf32> -> vector<8x1024xf32>
    %7 = tpu.iota {dimensions = array<i32: 0>} : vector<8x1xi32>
    %c2_i32 = arith.constant 2 : i32
    %8 = vector.broadcast %c2_i32 : i32 to vector<8x1xi32>
    %9 = arith.cmpi slt, %7, %8 : vector<8x1xi32>
    %10 = arith.extui %9 : vector<8x1xi1> to vector<8x1xi32>
    %11 = arith.sitofp %10 : vector<8x1xi32> to vector<8x1xf32>
    %cst_6 = arith.constant dense<0.000000e+00> : vector<1024xf32>
    %12 = vector.multi_reduction <add>, %6, %cst_6 [0] : vector<8x1024xf32> to vector<1024xf32>
    %13 = vector.shape_cast %12 : vector<1024xf32> to vector<1x1024xf32>
    %cst_7 = arith.constant 5.000000e-01 : f32
    %14 = vector.broadcast %cst_7 : f32 to vector<1x1024xf32>
    %15 = arith.mulf %13, %14 : vector<1x1024xf32>
    %16 = vector.broadcast %15 : vector<1x1024xf32> to vector<8x1024xf32>
    %17 = arith.subf %6, %16 : vector<8x1024xf32>
    %18 = vector.broadcast %11 : vector<8x1xf32> to vector<8x1024xf32>
    %19 = arith.mulf %17, %18 : vector<8x1024xf32>
    %20 = arith.mulf %19, %19 : vector<8x1024xf32>
    %cst_8 = arith.constant dense<0.000000e+00> : vector<1024xf32>
    %21 = vector.multi_reduction <add>, %20, %cst_8 [0] : vector<8x1024xf32> to vector<1024xf32>
    %22 = vector.shape_cast %21 : vector<1024xf32> to vector<1x1024xf32>
    %cst_9 = arith.constant 5.000000e-01 : f32
    %23 = vector.broadcast %cst_9 : f32 to vector<1x1024xf32>
    %24 = arith.mulf %22, %23 : vector<1x1024xf32>
    %cst_10 = arith.constant 9.99999974E-6 : f32
    %25 = vector.broadcast %cst_10 : f32 to vector<1x1024xf32>
    %26 = arith.addf %24, %25 : vector<1x1024xf32>
    %27 = math.rsqrt %26 : vector<1x1024xf32>
    %28 = vector.broadcast %27 : vector<1x1024xf32> to vector<8x1024xf32>
    %29 = arith.mulf %19, %28 : vector<8x1024xf32>
    %c0_11 = arith.constant 0 : index
    %c0_12 = arith.constant 0 : index
    %30 = vector.load %arg2[%c0_11, %c0_12] : memref<1x1024xf32, #tpu.memory_space<vmem>>, vector<1x1024xf32>
    %31 = vector.broadcast %30 : vector<1x1024xf32> to vector<8x1024xf32>
    %32 = arith.mulf %29, %31 : vector<8x1024xf32>
    %c0_13 = arith.constant 0 : index
    %c0_14 = arith.constant 0 : index
    %33 = vector.load %arg3[%c0_13, %c0_14] : memref<1x1024xf32, #tpu.memory_space<vmem>>, vector<1x1024xf32>
    %34 = vector.broadcast %33 : vector<1x1024xf32> to vector<8x1024xf32>
    %35 = arith.addf %32, %34 : vector<8x1024xf32>
    %cst_15 = arith.constant 0.000000e+00 : f32
    %36 = vector.broadcast %cst_15 : f32 to vector<8x1024xf32>
    %37 = arith.cmpf oge, %35, %36 : vector<8x1024xf32>
    %cst_16 = arith.constant 1.000000e-01 : f32
    %38 = vector.broadcast %cst_16 : f32 to vector<8x1024xf32>
    %39 = arith.mulf %38, %35 : vector<8x1024xf32>
    %40 = arith.select %37, %35, %39 : vector<8x1024xi1>, vector<8x1024xf32>
    %41 = arith.truncf %40 : vector<8x1024xf32> to vector<8x1024xbf16>
    %c0_17 = arith.constant 0 : index
    %c0_18 = arith.constant 0 : index
    %42 = vector.load %arg4[%c0_17, %c0_18] : memref<1024x128xbf16, #tpu.memory_space<vmem>>, vector<1024x128xbf16>
    %cst_19 = arith.constant dense<0.000000e+00> : vector<8x128xf32>
    %43 = tpu.matmul %41, %42, %cst_19 {dimension_numbers = #tpu.dot_dimension_numbers<[1], [0], [0], [1], [0, 0, 1, 1], [], []>} : vector<8x1024xbf16>, vector<1024x128xbf16>, vector<8x128xf32> -> vector<8x128xf32>
    %c0_20 = arith.constant 0 : index
    %c0_21 = arith.constant 0 : index
    %44 = vector.load %arg6[%c0_20, %c0_21] : memref<8x128xf32, #tpu.memory_space<vmem>>, vector<8x128xf32>
    tpu.vector_store %arg6[%c0_20, %c0_21], %43 {strides = array<i32>} : memref<8x128xf32, #tpu.memory_space<vmem>>, vector<8x128xf32>,
    %45 = arith.mulf %43, %43 : vector<8x128xf32>
    %cst_22 = arith.constant dense<0.000000e+00> : vector<8xf32>
    %46 = vector.multi_reduction <add>, %45, %cst_22 [1] : vector<8x128xf32> to vector<8xf32>
    %47 = vector.shape_cast %46 : vector<8xf32> to vector<8x1xf32>
    %cst_23 = arith.constant 1.000000e-24 : f32
    %48 = vector.broadcast %cst_23 : f32 to vector<8x1xf32>
    %49 = arith.maximumf %47, %48 : vector<8x1xf32>
    %50 = math.rsqrt %49 : vector<8x1xf32>
    %51 = vector.broadcast %50 : vector<8x1xf32> to vector<8x128xf32>
    %52 = arith.mulf %43, %51 : vector<8x128xf32>
    %53 = arith.truncf %52 : vector<8x128xf32> to vector<8x128xbf16>
    %c0_24 = arith.constant 0 : index
    %c0_25 = arith.constant 0 : index
    %54 = vector.load %arg5[%c0_24, %c0_25] : memref<128x128xbf16, #tpu.memory_space<vmem>>, vector<128x128xbf16>
    %cst_26 = arith.constant dense<0.000000e+00> : vector<8x128xf32>
    %55 = tpu.matmul %53, %54, %cst_26 {dimension_numbers = #tpu.dot_dimension_numbers<[1], [0], [0], [1], [0, 0, 1, 1], [], []>} : vector<8x128xbf16>, vector<128x128xbf16>, vector<8x128xf32> -> vector<8x128xf32>
    %56 = arith.mulf %55, %55 : vector<8x128xf32>
    %cst_27 = arith.constant 1.000000e+00 : f32
    %57 = vector.broadcast %cst_27 : f32 to vector<8x128xf32>
    %58 = arith.subf %57, %56 : vector<8x128xf32>
    %cst_28 = arith.constant 0.000000e+00 : f32
    %59 = vector.broadcast %cst_28 : f32 to vector<8x128xf32>
    %60 = arith.maximumf %58, %59 : vector<8x128xf32>
    %61 = math.sqrt %60 : vector<8x128xf32>
    %cst_29 = arith.constant 0.540302277 : f32
    %62 = vector.broadcast %cst_29 : f32 to vector<8x128xf32>
    %63 = arith.mulf %55, %62 : vector<8x128xf32>
    %cst_30 = arith.constant 0.841470957 : f32
    %64 = vector.broadcast %cst_30 : f32 to vector<8x128xf32>
    %65 = arith.mulf %61, %64 : vector<8x128xf32>
    %66 = arith.subf %63, %65 : vector<8x128xf32>
    %cst_31 = arith.constant 1.000000e+01 : f32
    %67 = vector.broadcast %cst_31 : f32 to vector<8x128xf32>
    %68 = arith.mulf %67, %66 : vector<8x128xf32>
    %69 = math.exp %68 : vector<8x128xf32>
    %cst_32 = arith.constant 1.000000e+01 : f32
    %70 = vector.broadcast %cst_32 : f32 to vector<8x128xf32>
    %71 = arith.mulf %70, %55 : vector<8x128xf32>
    %72 = math.exp %71 : vector<8x128xf32>
    %73 = tpu.iota {dimensions = array<i32: 1>} : vector<1x128xi32>
    %c25_i32 = arith.constant 25 : i32
    %74 = vector.broadcast %c25_i32 : i32 to vector<1x128xi32>
    %75 = arith.cmpi slt, %73, %74 : vector<1x128xi32>
    %cst_33 = arith.constant 0.000000e+00 : f32
    %76 = vector.shape_cast %75 : vector<1x128xi1> to vector<1x128xi1>
    %77 = vector.broadcast %76 : vector<1x128xi1> to vector<8x128xi1>
    %78 = vector.broadcast %cst_33 : f32 to vector<8x128xf32>
    %79 = arith.select %77, %72, %78 : vector<8x128xi1>, vector<8x128xf32>
    %cst_34 = arith.constant dense<0.000000e+00> : vector<8xf32>
    %80 = vector.multi_reduction <add>, %79, %cst_34 [1] : vector<8x128xf32> to vector<8xf32>
    %81 = vector.shape_cast %80 : vector<8xf32> to vector<8x1xf32>
    %82 = vector.broadcast %81 : vector<8x1xf32> to vector<8x128xf32>
    %83 = arith.subf %82, %72 : vector<8x128xf32>
    %84 = arith.addf %83, %69 : vector<8x128xf32>
    %85 = arith.divf %69, %84 : vector<8x128xf32>
    %c0_35 = arith.constant 0 : index
    %c0_36 = arith.constant 0 : index
    %86 = vector.load %arg7[%c0_35, %c0_36] : memref<8x128xf32, #tpu.memory_space<vmem>>, vector<8x128xf32>
    tpu.vector_store %arg7[%c0_35, %c0_36], %85 {strides = array<i32>} : memref<8x128xf32, #tpu.memory_space<vmem>>, vector<8x128xf32>,
    return
  }
}

</mosaic_0001>

<llo_original>
// kernel: facenet_forward.1
$region0: #{facenet_forward.1}
  #allocation0 [shape = 'u32[]', space=smem, size = 0x4, offset = 0x4, fixed_abs, tag = 'smem constant byte address 0x4 - core index']
  #allocation1 [shape = 'u32[144,128]{1,0:T(1,128)}', space=vmem, size = 0x12000, scoped, tag = 'internal scratch']
  %s0 = inlined_call_operand.vmem [shape: f32[8,4,256], index: 0, kind: input, shape index: {}]
  %s1 = inlined_call_operand.vmem [shape: bf16[4,1024], index: 1, kind: input, shape index: {}]
  %s2 = inlined_call_operand.vmem [shape: f32[1,1024], index: 2, kind: input, shape index: {}]
  %s3 = inlined_call_operand.vmem [shape: f32[1,1024], index: 3, kind: input, shape index: {}]
  %s4 = inlined_call_operand.hbm [shape: bf16[1024,128], index: 4, kind: input, shape index: {}]
  %s5 = inlined_call_operand.vmem [shape: bf16[128,128], index: 5, kind: input, shape index: {}]
  %s6 = inlined_call_operand.vmem [shape: f32[8,128], index: 6, kind: output, shape index: {0}]
  %s7 = inlined_call_operand.vmem [shape: f32[8,128], index: 7, kind: output, shape index: {1}]
  %8 = xla_tuple %s6, %s7
  %s9 = sld [smem:[#allocation0]]
  $region46: #{facenet_forward.1} parent=0
    _
  %s11 = ssub.s32 1, %s9
  %s12 = scalar_select 0, %s11, %s9
  $region1: #{facenet_forward.1} parent=0
    #allocation2 [shape = 'u8[262144]{0}', space=vmem, size = 0x40000, scoped, tag = 'input window, operand 4, single buffered']
    #allocation3 [shape = 's32[1]{0}', space=sflag, size = 0x4, scoped, tag = 'scoped memory for facenet_forward.1']
    %13 = vsyncpa [#allocation3], 0
    // Predicated region
    $region2: #{facenet_forward.1} parent=1 // pred_check
      _
    $region3: #{facenet_forward.1} parent=1 // pred_check_branch
      %15 = sbr.rel (0) target = $region5
    $region4: #{facenet_forward.1} parent=1 // pred_region
      _
    $region5: #{facenet_forward.1} parent=1 // pred_fallthru
      _
    // Predicated region
    $region6: #{facenet_forward.1} parent=1 // pred_check
      _
    $region7: #{facenet_forward.1} parent=1 // pred_check_branch
      %17 = sbr.rel (0) target = $region9
    $region8: #{facenet_forward.1} parent=1 // pred_region
      _
    $region9: #{facenet_forward.1} parent=1 // pred_fallthru
      _
    // Predicated region
    $region10: #{facenet_forward.1} parent=1 // pred_check
      _
    $region11: #{facenet_forward.1} parent=1 // pred_check_branch
      %19 = sbr.rel (0) target = $region13
    $region12: #{facenet_forward.1} parent=1 // pred_region
      _
    $region13: #{facenet_forward.1} parent=1 // pred_fallthru
      _
    // Predicated region
    $region14: #{facenet_forward.1} parent=1 // pred_check
      _
    $region15: #{facenet_forward.1} parent=1 // pred_check_branch
      %21 = sbr.rel (0) target = $region17
    $region16: #{facenet_forward.1} parent=1 // pred_region
      _
    $region17: #{facenet_forward.1} parent=1 // pred_fallthru
      _
    // Predicated region
    $region18: #{facenet_forward.1} parent=1 // pred_check
      _
    $region19: #{facenet_forward.1} parent=1 // pred_check_branch
      %23 = sbr.rel (0) target = $region21
    $region20: #{facenet_forward.1} parent=1 // pred_region
      %s25 = ssub.s32 8192, 8192
      %26 = vsyncadd [#allocation3], %s25
      %s27 = sshll.u32 [#allocation2], 4
      %s28 = int_to_ptr.vmem [resolvable:$true] %s27
      %33 = dma.hbm_to_vmem [thread:$0]  %s4, 8192, %s28, [#allocation3], 64, 64, 4
    $region21: #{facenet_forward.1} parent=1 // pred_fallthru
      _
    // Predicated region
    $region22: #{facenet_forward.1} parent=1 // pred_check
      _
    $region23: #{facenet_forward.1} parent=1 // pred_check_branch
      %35 = sbr.rel (0) target = $region25
    $region24: #{facenet_forward.1} parent=1 // pred_region
      _
    $region25: #{facenet_forward.1} parent=1 // pred_fallthru
      _
    // Predicated region
    $region26: #{facenet_forward.1} parent=1 // pred_check
      _
    $region27: #{facenet_forward.1} parent=1 // pred_check_branch
      %37 = sbr.rel (0) target = $region29
    $region28: #{facenet_forward.1} parent=1 // pred_region
      %38 = dma.done [#allocation3], 8192
    $region29: #{facenet_forward.1} parent=1 // pred_fallthru
      _
    %v40 = vld [vmem:[%s0] sm:$0xff]
    %v41 = vld [vmem:[%s0 + $0x8] sm:$0xff]
    %v42 = vld [vmem:[%s0 + $0x10] sm:$0xff]
    %v43 = vld [vmem:[%s0 + $0x18] sm:$0xff]
    %v44 = vld [vmem:[%s0 + $0x20] sm:$0xff]
    %v45 = vld [vmem:[%s0 + $0x28] sm:$0xff]
    %v46 = vld [vmem:[%s0 + $0x30] sm:$0xff]
    %v47 = vld [vmem:[%s0 + $0x38] sm:$0xff]
    %v56 = vcombine.high %v40, %v40
    %v57 = vcombine.high %v41, %v41
    %v58 = vcombine.high %v42, %v42
    %v59 = vcombine.high %v43, %v43
    %v60 = vcombine.high %v44, %v44
    %v61 = vcombine.high %v45, %v45
    %v62 = vcombine.high %v46, %v46
    %v63 = vcombine.high %v47, %v47
    %vm72 = vcmask 1043456
    %v73 = vsel %vm72, %v40, 0.0
    %v74 = vsel %vm72, %v56, 0.0
    %v75 = vadd.f32 %v73, %v74
    %76 = vadd.xlane.f32.xlu0 %v75
    %v77 = vpop.xlane.xlu0 %76
    %v78 = vsel %vm72, %v41, 0.0
    %v79 = vsel %vm72, %v57, 0.0
    %v80 = vadd.f32 %v78, %v79
    %81 = vadd.xlane.f32.xlu0 %v80
    %v82 = vpop.xlane.xlu0 %81
    %v83 = vsel %vm72, %v42, 0.0
    %v84 = vsel %vm72, %v58, 0.0
    %v85 = vadd.f32 %v83, %v84
    %86 = vadd.xlane.f32.xlu0 %v85
    %v87 = vpop.xlane.xlu0 %86
    %v88 = vsel %vm72, %v43, 0.0
    %v89 = vsel %vm72, %v59, 0.0
    %v90 = vadd.f32 %v88, %v89
    %91 = vadd.xlane.f32.xlu0 %v90
    %v92 = vpop.xlane.xlu0 %91
    %v93 = vsel %vm72, %v44, 0.0
    %v94 = vsel %vm72, %v60, 0.0
    %v95 = vadd.f32 %v93, %v94
    %96 = vadd.xlane.f32.xlu0 %v95
    %v97 = vpop.xlane.xlu0 %96
    %v98 = vsel %vm72, %v45, 0.0
    %v99 = vsel %vm72, %v61, 0.0
    %v100 = vadd.f32 %v98, %v99
    %101 = vadd.xlane.f32.xlu0 %v100
    %v102 = vpop.xlane.xlu0 %101
    %v103 = vsel %vm72, %v46, 0.0
    %v104 = vsel %vm72, %v62, 0.0
    %v105 = vadd.f32 %v103, %v104
    %106 = vadd.xlane.f32.xlu0 %v105
    %v107 = vpop.xlane.xlu0 %106
    %v108 = vsel %vm72, %v47, 0.0
    %v109 = vsel %vm72, %v63, 0.0
    %v110 = vadd.f32 %v108, %v109
    %111 = vadd.xlane.f32.xlu0 %v110
    %v112 = vpop.xlane.xlu0 %111
    %v113 = vrcp.pop 256.0
    %v114 = vmul.f32 %v77, %v113
    %v115 = vmul.f32 %v82, %v113
    %v116 = vmul.f32 %v87, %v113
    %v117 = vmul.f32 %v92, %v113
    %v118 = vmul.f32 %v97, %v113
    %v119 = vmul.f32 %v102, %v113
    %v120 = vmul.f32 %v107, %v113
    %v121 = vmul.f32 %v112, %v113
    %v122 = vpack.c.bf16 %v114, %v114
    %v123 = vpack.c.bf16 %v115, %v115
    %v124 = vpack.c.bf16 %v116, %v116
    %v125 = vpack.c.bf16 %v117, %v117
    %v126 = vpack.c.bf16 %v118, %v118
    %v127 = vpack.c.bf16 %v119, %v119
    %v128 = vpack.c.bf16 %v120, %v120
    %v129 = vpack.c.bf16 %v121, %v121
    %v130 = vld [vmem:[%s1] sm:$0xff]
    %v131 = vld [vmem:[%s1 + $0x8] sm:$0xff]
    %v140 = vunpack.c.l.b16 %v122
    %v141 = vunpack.c.l.b16 %v123
    %v142 = vunpack.c.l.b16 %v124
    %v143 = vunpack.c.l.b16 %v125
    %v144 = vunpack.c.l.b16 %v126
    %v145 = vunpack.c.l.b16 %v127
    %v146 = vunpack.c.l.b16 %v128
    %v147 = vunpack.c.l.b16 %v129
    %v148 = vlaneseq
    %v149 = vand.u32 %v148, 127
    %v150 = vlaneseq
    %v151 = vshrl.u32 %v150, 7
    %v152 = vsub.s32 %v149, %v151
    %v153 = vrot.slane %v140, %v152
    %v154 = vlaneseq
    %v155 = vshrl.u32 %v154, 7
    %v156 = vsub.s32 %v149, %v155
    %v157 = vrot.slane %v141, %v156
    %v158 = vlaneseq
    %v159 = vshrl.u32 %v158, 7
    %v160 = vsub.s32 %v149, %v159
    %v161 = vrot.slane %v142, %v160
    %v162 = vlaneseq
    %v163 = vshrl.u32 %v162, 7
    %v164 = vsub.s32 %v149, %v163
    %v165 = vrot.slane %v143, %v164
    %v166 = vlaneseq
    %v167 = vshrl.u32 %v166, 7
    %v168 = vsub.s32 %v149, %v167
    %v169 = vrot.slane %v144, %v168
    %v170 = vlaneseq
    %v171 = vshrl.u32 %v170, 7
    %v172 = vsub.s32 %v149, %v171
    %v173 = vrot.slane %v145, %v172
    %v174 = vlaneseq
    %v175 = vshrl.u32 %v174, 7
    %v176 = vsub.s32 %v149, %v175
    %v177 = vrot.slane %v146, %v176
    %v178 = vlaneseq
    %v179 = vshrl.u32 %v178, 7
    %v180 = vsub.s32 %v149, %v179
    %v181 = vrot.slane %v147, %v180
    %vm182 = vcmask 1041409
    %v183 = vsel %vm182, %v157, %v153
    %vm184 = vcmask 1042434
    %v185 = vsel %vm184, %v161, %v183
    %vm186 = vcmask 1043459
    %v187 = vsel %vm186, %v165, %v185
    %vm188 = vcmask 1044484
    %v189 = vsel %vm188, %v169, %v187
    %vm190 = vcmask 1045509
    %v191 = vsel %vm190, %v173, %v189
    %vm192 = vcmask 1046534
    %v193 = vsel %vm192, %v177, %v191
    %vm194 = vcmask 1047559
    %v195 = vsel %vm194, %v181, %v193
    %v196 = vpack.c.b16 %v195, %v195
    %v199 = vcombine.high %v130, %v130
    %v201 = vunpack.c.l.s4 1983009808
    %v202 = vunpack.c.0.s8 %v201
    %v203 = vlaneseq
    %v204 = vshrl.u32 %v203, 7
    %v205 = vsub.s32 %v202, %v204
    %v206 = vrot.slane %v130, %v205
    %v208 = vunpack.c.l.s4 1983009808
    %v209 = vunpack.c.0.s8 %v208
    %v210 = vlaneseq
    %v211 = vshrl.u32 %v210, 7
    %v212 = vsub.s32 %v209, %v211
    %v213 = vrot.slane %v199, %v212
    %v214 = vcombine.high %v206, %v206
    %v215 = vcombine.high %v213, %v213
    %v216 = vcombine.high %v131, %v131
    %v218 = vunpack.c.l.s4 1983009808
    %v219 = vunpack.c.0.s8 %v218
    %v220 = vlaneseq
    %v221 = vshrl.u32 %v220, 7
    %v222 = vsub.s32 %v219, %v221
    %v223 = vrot.slane %v131, %v222
    %v225 = vunpack.c.l.s4 1983009808
    %v226 = vunpack.c.0.s8 %v225
    %v227 = vlaneseq
    %v228 = vshrl.u32 %v227, 7
    %v229 = vsub.s32 %v226, %v228
    %v230 = vrot.slane %v216, %v229
    %v231 = vcombine.high %v223, %v223
    %v232 = vcombine.high %v230, %v230
    %vm233 = vcmask 31744
    %v235 = vsel %vm233, %v196, 0
    %vm237 = vcmask 1041408
    %v239 = vsel %vm237, %v206, 0
    %v242 = vsel %vm237, %v214, 0
    %v245 = vsel %vm237, %v213, 0
    %v248 = vsel %vm237, %v215, 0
    %v251 = vsel %vm237, %v223, 0
    %v254 = vsel %vm237, %v231, 0
    %v257 = vsel %vm237, %v230, 0
    %v260 = vsel %vm237, %v232, 0
    %262 = vmatprep.subr.bf16.mxu0 %v242
    %263 = vmatpush1.bf16.msra.mxu0 %v239
    %264 = vmatprep.subr.bf16.mxu0 0
    %265 = vmatpush1.bf16.msra.mxu0 0
    %266 = vmatprep.subr.bf16.mxu0 0
    %267 = vmatpush1.bf16.msra.mxu0 0
    %268 = vmatprep.subr.bf16.mxu0 0
    %269 = vmatpush1.bf16.msra.mxu0 0
    %270 = vmatprep.subr.bf16.mxu0 0
    %271 = vmatpush1.bf16.msra.mxu0 0
    %272 = vmatprep.subr.bf16.mxu0 0
    %273 = vmatpush1.bf16.msra.mxu0 0
    %274 = vmatprep.subr.bf16.mxu0 0
    %275 = vmatpush1.bf16.msra.mxu0 0
    %276 = vmatprep.subr.bf16.mxu0 0
    %277 = vmatpush1.bf16.msra.mxu0 0
    %278 = vmatprep.subr.bf16.mxu0 0
    %279 = vmatpush1.bf16.msra.mxu0 0
    %280 = vmatprep.subr.bf16.mxu0 0
    %281 = vmatpush1.bf16.msra.mxu0 0
    %282 = vmatprep.subr.bf16.mxu0 0
    %283 = vmatpush1.bf16.msra.mxu0 0
    %284 = vmatprep.subr.bf16.mxu0 0
    %285 = vmatpush1.bf16.msra.mxu0 0
    %286 = vmatprep.subr.bf16.mxu0 0
    %287 = vmatpush1.bf16.msra.mxu0 0
    %288 = vmatprep.subr.bf16.mxu0 0
    %289 = vmatpush1.bf16.msra.mxu0 0
    %290 = vmatprep.subr.bf16.mxu0 0
    %291 = vmatpush1.bf16.msra.mxu0 0
    %292 = vmatprep.subr.bf16.mxu0 0
    %293 = vmatpush1.bf16.msra.mxu0 0
    %294 = vmatprep.mubr.bf16.mxu0 0
    %295 = vmatmul.mubr.bf16.gmra.mrb[0].mxu0 %v235
    %v296 = vpop.f32.mrb[0].mxu0
    %v297 = vadd.f32 0.0, %v296
    %v298 = vpop.f32.mrb[0].mxu0
    %v299 = vadd.f32 0.0, %v298
    %v300 = vpop.f32.mrb[0].mxu0
    %v301 = vpop.f32.mrb[0].mxu0
    %302 = vdwg.mxu0
    %303 = vmatprep.subr.bf16.mxu0 %v248
    %304 = vmatpush1.bf16.msra.mxu0 %v245
    %305 = vmatprep.subr.bf16.mxu0 0
    %306 = vmatpush1.bf16.msra.mxu0 0
    %307 = vmatprep.subr.bf16.mxu0 0
    %308 = vmatpush1.bf16.msra.mxu0 0
    %309 = vmatprep.subr.bf16.mxu0 0
    %310 = vmatpush1.bf16.msra.mxu0 0
    %311 = vmatprep.subr.bf16.mxu0 0
    %312 = vmatpush1.bf16.msra.mxu0 0
    %313 = vmatprep.subr.bf16.mxu0 0
    %314 = vmatpush1.bf16.msra.mxu0 0
    %315 = vmatprep.subr.bf16.mxu0 0
    %316 = vmatpush1.bf16.msra.mxu0 0
    %317 = vmatprep.subr.bf16.mxu0 0
    %318 = vmatpush1.bf16.msra.mxu0 0
    %319 = vmatprep.subr.bf16.mxu0 0
    %320 = vmatpush1.bf16.msra.mxu0 0
    %321 = vmatprep.subr.bf16.mxu0 0
    %322 = vmatpush1.bf16.msra.mxu0 0
    %323 = vmatprep.subr.bf16.mxu0 0
    %324 = vmatpush1.bf16.msra.mxu0 0
    %325 = vmatprep.subr.bf16.mxu0 0
    %326 = vmatpush1.bf16.msra.mxu0 0
    %327 = vmatprep.subr.bf16.mxu0 0
    %328 = vmatpush1.bf16.msra.mxu0 0
    %329 = vmatprep.subr.bf16.mxu0 0
    %330 = vmatpush1.bf16.msra.mxu0 0
    %331 = vmatprep.subr.bf16.mxu0 0
    %332 = vmatpush1.bf16.msra.mxu0 0
    %333 = vmatprep.subr.bf16.mxu0 0
    %334 = vmatpush1.bf16.msra.mxu0 0
    %335 = vmatprep.mubr.bf16.mxu0 0
    %336 = vmatmul.mubr.bf16.gmra.mrb[0].mxu0 %v235
    %v337 = vpop.f32.mrb[0].mxu0
    %v338 = vadd.f32 0.0, %v337
    %v339 = vpop.f32.mrb[0].mxu0
    %v340 = vadd.f32 0.0, %v339
    %v341 = vpop.f32.mrb[0].mxu0
    %v342 = vpop.f32.mrb[0].mxu0
    %343 = vdwg.mxu0
    %344 = vmatprep.subr.bf16.mxu0 %v254
    %345 = vmatpush1.bf16.msra.mxu0 %v251
    %346 = vmatprep.subr.bf16.mxu0 0
    %347 = vmatpush1.bf16.msra.mxu0 0
    %348 = vmatprep.subr.bf16.mxu0 0
    %349 = vmatpush1.bf16.msra.mxu0 0
    %350 = vmatprep.subr.bf16.mxu0 0
    %351 = vmatpush1.bf16.msra.mxu0 0
    %352 = vmatprep.subr.bf16.mxu0 0
    %353 = vmatpush1.bf16.msra.mxu0 0
    %354 = vmatprep.subr.bf16.mxu0 0
    %355 = vmatpush1.bf16.msra.mxu0 0
    %356 = vmatprep.subr.bf16.mxu0 0
    %357 = vmatpush1.bf16.msra.mxu0 0
    %358 = vmatprep.subr.bf16.mxu0 0
    %359 = vmatpush1.bf16.msra.mxu0 0
    %360 = vmatprep.subr.bf16.mxu0 0
    %361 = vmatpush1.bf16.msra.mxu0 0
    %362 = vmatprep.subr.bf16.mxu0 0
    %363 = vmatpush1.bf16.msra.mxu0 0
    %364 = vmatprep.subr.bf16.mxu0 0
    %365 = vmatpush1.bf16.msra.mxu0 0
    %366 = vmatprep.subr.bf16.mxu0 0
    %367 = vmatpush1.bf16.msra.mxu0 0
    %368 = vmatprep.subr.bf16.mxu0 0
    %369 = vmatpush1.bf16.msra.mxu0 0
    %370 = vmatprep.subr.bf16.mxu0 0
    %371 = vmatpush1.bf16.msra.mxu0 0
    %372 = vmatprep.subr.bf16.mxu0 0
    %373 = vmatpush1.bf16.msra.mxu0 0
    %374 = vmatprep.subr.bf16.mxu0 0
    %375 = vmatpush1.bf16.msra.mxu0 0
    %376 = vmatprep.mubr.bf16.mxu0 0
    %377 = vmatmul.mubr.bf16.gmra.mrb[0].mxu0 %v235
    %v378 = vpop.f32.mrb[0].mxu0
    %v379 = vadd.f32 0.0, %v378
    %v380 = vpop.f32.mrb[0].mxu0
    %v381 = vadd.f32 0.0, %v380
    %v382 = vpop.f32.mrb[0].mxu0
    %v383 = vpop.f32.mrb[0].mxu0
    %384 = vdwg.mxu0
    %385 = vmatprep.subr.bf16.mxu0 %v260
    %386 = vmatpush1.bf16.msra.mxu0 %v257
    %387 = vmatprep.subr.bf16.mxu0 0
    %388 = vmatpush1.bf16.msra.mxu0 0
    %389 = vmatprep.subr.bf16.mxu0 0
    %390 = vmatpush1.bf16.msra.mxu0 0
    %391 = vmatprep.subr.bf16.mxu0 0
    %392 = vmatpush1.bf16.msra.mxu0 0
    %393 = vmatprep.subr.bf16.mxu0 0
    %394 = vmatpush1.bf16.msra.mxu0 0
    %395 = vmatprep.subr.bf16.mxu0 0
    %396 = vmatpush1.bf16.msra.mxu0 0
    %397 = vmatprep.subr.bf16.mxu0 0
    %398 = vmatpush1.bf16.msra.mxu0 0
    %399 = vmatprep.subr.bf16.mxu0 0
    %400 = vmatpush1.bf16.msra.mxu0 0
    %401 = vmatprep.subr.bf16.mxu0 0
    %402 = vmatpush1.bf16.msra.mxu0 0
    %403 = vmatprep.subr.bf16.mxu0 0
    %404 = vmatpush1.bf16.msra.mxu0 0
    %405 = vmatprep.subr.bf16.mxu0 0
    %406 = vmatpush1.bf16.msra.mxu0 0
    %407 = vmatprep.subr.bf16.mxu0 0
    %408 = vmatpush1.bf16.msra.mxu0 0
    %409 = vmatprep.subr.bf16.mxu0 0
    %410 = vmatpush1.bf16.msra.mxu0 0
    %411 = vmatprep.subr.bf16.mxu0 0
    %412 = vmatpush1.bf16.msra.mxu0 0
    %413 = vmatprep.subr.bf16.mxu0 0
    %414 = vmatpush1.bf16.msra.mxu0 0
    %415 = vmatprep.subr.bf16.mxu0 0
    %416 = vmatpush1.bf16.msra.mxu0 0
    %417 = vmatprep.mubr.bf16.mxu0 0
    %418 = vmatmul.mubr.bf16.gmra.mrb[0].mxu0 %v235
    %v419 = vpop.f32.mrb[0].mxu0
    %v420 = vadd.f32 0.0, %v419
    %v421 = vpop.f32.mrb[0].mxu0
    %v422 = vadd.f32 0.0, %v421
    %v423 = vpop.f32.mrb[0].mxu0
    %v424 = vpop.f32.mrb[0].mxu0
    %425 = vdwg.mxu0
    %v426 = vlaneseq
    %v427 = vshrl.u32 %v426, 7
    %vm428 = vcmp.lt.s32.totalorder %v427, 2
    %v429 = vsel %vm428, 1, 0
    %v430 = vcvt.s32.f32 %v429
    %v431 = vrot.slane %v297, 4
    %v432 = vadd.f32 %v297, %v431
    %v433 = vrot.slane %v432, 2
    %v434 = vadd.f32 %v432, %v433
    %v435 = vrot.slane %v434, 1
    %v436 = vadd.f32 %v434, %v435
    %v437 = vrot.slane %v299, 4
    %v438 = vadd.f32 %v299, %v437
    %v439 = vrot.slane %v438, 2
    %v440 = vadd.f32 %v438, %v439
    %v441 = vrot.slane %v440, 1
    %v442 = vadd.f32 %v440, %v441
    %v443 = vrot.slane %v338, 4
    %v444 = vadd.f32 %v338, %v443
    %v445 = vrot.slane %v444, 2
    %v446 = vadd.f32 %v444, %v445
    %v447 = vrot.slane %v446, 1
    %v448 = vadd.f32 %v446, %v447
    %v449 = vrot.slane %v340, 4
    %v450 = vadd.f32 %v340, %v449
    %v451 = vrot.slane %v450, 2
    %v452 = vadd.f32 %v450, %v451
    %v453 = vrot.slane %v452, 1
    %v454 = vadd.f32 %v452, %v453
    %v455 = vrot.slane %v379, 4
    %v456 = vadd.f32 %v379, %v455
    %v457 = vrot.slane %v456, 2
    %v458 = vadd.f32 %v456, %v457
    %v459 = vrot.slane %v458, 1
    %v460 = vadd.f32 %v458, %v459
    %v461 = vrot.slane %v381, 4
    %v462 = vadd.f32 %v381, %v461
    %v463 = vrot.slane %v462, 2
    %v464 = vadd.f32 %v462, %v463
    %v465 = vrot.slane %v464, 1
    %v466 = vadd.f32 %v464, %v465
    %v467 = vrot.slane %v420, 4
    %v468 = vadd.f32 %v420, %v467
    %v469 = vrot.slane %v468, 2
    %v470 = vadd.f32 %v468, %v469
    %v471 = vrot.slane %v470, 1
    %v472 = vadd.f32 %v470, %v471
    %v473 = vrot.slane %v422, 4
    %v474 = vadd.f32 %v422, %v473
    %v475 = vrot.slane %v474, 2
    %v476 = vadd.f32 %v474, %v475
    %v477 = vrot.slane %v476, 1
    %v478 = vadd.f32 %v476, %v477
    %v479 = vmul.f32 %v436, 0.5
    %v480 = vmul.f32 %v442, 0.5
    %v481 = vmul.f32 %v448, 0.5
    %v482 = vmul.f32 %v454, 0.5
    %v483 = vmul.f32 %v460, 0.5
    %v484 = vmul.f32 %v466, 0.5
    %v485 = vmul.f32 %v472, 0.5
    %v486 = vmul.f32 %v478, 0.5
    %v487 = vsub.f32 %v297, %v479
    %v488 = vsub.f32 %v299, %v480
    %v489 = vsub.f32 %v338, %v481
    %v490 = vsub.f32 %v340, %v482
    %v491 = vsub.f32 %v379, %v483
    %v492 = vsub.f32 %v381, %v484
    %v493 = vsub.f32 %v420, %v485
    %v494 = vsub.f32 %v422, %v486
    %v495 = vmul.f32 %v487, %v430
    %v496 = vmul.f32 %v488, %v430
    %v497 = vmul.f32 %v489, %v430
    %v498 = vmul.f32 %v490, %v430
    %v499 = vmul.f32 %v491, %v430
    %v500 = vmul.f32 %v492, %v430
    %v501 = vmul.f32 %v493, %v430
    %v502 = vmul.f32 %v494, %v430
    %v503 = vmul.f32 %v495, %v495
    %v504 = vmul.f32 %v496, %v496
    %v505 = vmul.f32 %v497, %v497
    %v506 = vmul.f32 %v498, %v498
    %v507 = vmul.f32 %v499, %v499
    %v508 = vmul.f32 %v500, %v500
    %v509 = vmul.f32 %v501, %v501
    %v510 = vmul.f32 %v502, %v502
    %v511 = vrot.slane %v503, 4
    %v512 = vadd.f32 %v503, %v511
    %v513 = vrot.slane %v512, 2
    %v514 = vadd.f32 %v512, %v513
    %v515 = vrot.slane %v514, 1
    %v516 = vadd.f32 %v514, %v515
    %v517 = vrot.slane %v504, 4
    %v518 = vadd.f32 %v504, %v517
    %v519 = vrot.slane %v518, 2
    %v520 = vadd.f32 %v518, %v519
    %v521 = vrot.slane %v520, 1
    %v522 = vadd.f32 %v520, %v521
    %v523 = vrot.slane %v505, 4
    %v524 = vadd.f32 %v505, %v523
    %v525 = vrot.slane %v524, 2
    %v526 = vadd.f32 %v524, %v525
    %v527 = vrot.slane %v526, 1
    %v528 = vadd.f32 %v526, %v527
    %v529 = vrot.slane %v506, 4
    %v530 = vadd.f32 %v506, %v529
    %v531 = vrot.slane %v530, 2
    %v532 = vadd.f32 %v530, %v531
    %v533 = vrot.slane %v532, 1
    %v534 = vadd.f32 %v532, %v533
    %v535 = vrot.slane %v507, 4
    %v536 = vadd.f32 %v507, %v535
    %v537 = vrot.slane %v536, 2
    %v538 = vadd.f32 %v536, %v537
    %v539 = vrot.slane %v538, 1
    %v540 = vadd.f32 %v538, %v539
    %v541 = vrot.slane %v508, 4
    %v542 = vadd.f32 %v508, %v541
    %v543 = vrot.slane %v542, 2
    %v544 = vadd.f32 %v542, %v543
    %v545 = vrot.slane %v544, 1
    %v546 = vadd.f32 %v544, %v545
    %v547 = vrot.slane %v509, 4
    %v548 = vadd.f32 %v509, %v547
    %v549 = vrot.slane %v548, 2
    %v550 = vadd.f32 %v548, %v549
    %v551 = vrot.slane %v550, 1
    %v552 = vadd.f32 %v550, %v551
    %v553 = vrot.slane %v510, 4
    %v554 = vadd.f32 %v510, %v553
    %v555 = vrot.slane %v554, 2
    %v556 = vadd.f32 %v554, %v555
    %v557 = vrot.slane %v556, 1
    %v558 = vadd.f32 %v556, %v557
    %v559 = vmul.f32 %v516, 0.5
    %v560 = vmul.f32 %v522, 0.5
    %v561 = vmul.f32 %v528, 0.5
    %v562 = vmul.f32 %v534, 0.5
    %v563 = vmul.f32 %v540, 0.5
    %v564 = vmul.f32 %v546, 0.5
    %v565 = vmul.f32 %v552, 0.5
    %v566 = vmul.f32 %v558, 0.5
    %v567 = vadd.f32 %v559, 1e-05
    %v568 = vadd.f32 %v560, 1e-05
    %v569 = vadd.f32 %v561, 1e-05
    %v570 = vadd.f32 %v562, 1e-05
    %v571 = vadd.f32 %v563, 1e-05
    %v572 = vadd.f32 %v564, 1e-05
    %v573 = vadd.f32 %v565, 1e-05
    %v574 = vadd.f32 %v566, 1e-05
    %v575 = vrsqrt.pop %v567
    %v576 = vrsqrt.pop %v568
    %v577 = vrsqrt.pop %v569
    %v578 = vrsqrt.pop %v570
    %v579 = vrsqrt.pop %v571
    %v580 = vrsqrt.pop %v572
    %v581 = vrsqrt.pop %v573
    %v582 = vrsqrt.pop %v574
    %v583 = vmul.f32 %v495, %v575
    %v584 = vmul.f32 %v496, %v576
    %v585 = vmul.f32 %v497, %v577
    %v586 = vmul.f32 %v498, %v578
    %v587 = vmul.f32 %v499, %v579
    %v588 = vmul.f32 %v500, %v580
    %v589 = vmul.f32 %v501, %v581
    %v590 = vmul.f32 %v502, %v582
    %v591 = vld [vmem:[%s2] sm:$0xff]
    %v593 = vlaneseq
    %v594 = vshrl.u32 %v593, 7
    %v595 = vsub.s32 0, %v594
    %v596 = vrot.slane %v591, %v595
    %v597 = vlaneseq
    %v598 = vshrl.u32 %v597, 7
    %v599 = vsub.s32 1, %v598
    %v600 = vrot.slane %v591, %v599
    %v601 = vlaneseq
    %v602 = vshrl.u32 %v601, 7
    %v603 = vsub.s32 2, %v602
    %v604 = vrot.slane %v591, %v603
    %v605 = vlaneseq
    %v606 = vshrl.u32 %v605, 7
    %v607 = vsub.s32 3, %v606
    %v608 = vrot.slane %v591, %v607
    %v609 = vlaneseq
    %v610 = vshrl.u32 %v609, 7
    %v611 = vsub.s32 4, %v610
    %v612 = vrot.slane %v591, %v611
    %v613 = vlaneseq
    %v614 = vshrl.u32 %v613, 7
    %v615 = vsub.s32 5, %v614
    %v616 = vrot.slane %v591, %v615
    %v617 = vlaneseq
    %v618 = vshrl.u32 %v617, 7
    %v619 = vsub.s32 6, %v618
    %v620 = vrot.slane %v591, %v619
    %v621 = vlaneseq
    %v622 = vshrl.u32 %v621, 7
    %v623 = vsub.s32 7, %v622
    %v624 = vrot.slane %v591, %v623
    %v633 = vmul.f32 %v583, %v596
    %v634 = vmul.f32 %v584, %v600
    %v635 = vmul.f32 %v585, %v604
    %v636 = vmul.f32 %v586, %v608
    %v637 = vmul.f32 %v587, %v612
    %v638 = vmul.f32 %v588, %v616
    %v639 = vmul.f32 %v589, %v620
    %v640 = vmul.f32 %v590, %v624
    %v641 = vld [vmem:[%s3] sm:$0xff]
    %v643 = vlaneseq
    %v644 = vshrl.u32 %v643, 7
    %v645 = vsub.s32 0, %v644
    %v646 = vrot.slane %v641, %v645
    %v647 = vlaneseq
    %v648 = vshrl.u32 %v647, 7
    %v649 = vsub.s32 1, %v648
    %v650 = vrot.slane %v641, %v649
    %v651 = vlaneseq
    %v652 = vshrl.u32 %v651, 7
    %v653 = vsub.s32 2, %v652
    %v654 = vrot.slane %v641, %v653
    %v655 = vlaneseq
    %v656 = vshrl.u32 %v655, 7
    %v657 = vsub.s32 3, %v656
    %v658 = vrot.slane %v641, %v657
    %v659 = vlaneseq
    %v660 = vshrl.u32 %v659, 7
    %v661 = vsub.s32 4, %v660
    %v662 = vrot.slane %v641, %v661
    %v663 = vlaneseq
    %v664 = vshrl.u32 %v663, 7
    %v665 = vsub.s32 5, %v664
    %v666 = vrot.slane %v641, %v665
    %v667 = vlaneseq
    %v668 = vshrl.u32 %v667, 7
    %v669 = vsub.s32 6, %v668
    %v670 = vrot.slane %v641, %v669
    %v671 = vlaneseq
    %v672 = vshrl.u32 %v671, 7
    %v673 = vsub.s32 7, %v672
    %v674 = vrot.slane %v641, %v673
    %v683 = vadd.f32 %v633, %v646
    %v684 = vadd.f32 %v634, %v650
    %v685 = vadd.f32 %v635, %v654
    %v686 = vadd.f32 %v636, %v658
    %v687 = vadd.f32 %v637, %v662
    %v688 = vadd.f32 %v638, %v666
    %v689 = vadd.f32 %v639, %v670
    %v690 = vadd.f32 %v640, %v674
    %vm691 = vcmp.ge.f32.partialorder %v683, 0.0
    %vm692 = vcmp.ge.f32.partialorder %v684, 0.0
    %vm693 = vcmp.ge.f32.partialorder %v685, 0.0
    %vm694 = vcmp.ge.f32.partialorder %v686, 0.0
    %vm695 = vcmp.ge.f32.partialorder %v687, 0.0
    %vm696 = vcmp.ge.f32.partialorder %v688, 0.0
    %vm697 = vcmp.ge.f32.partialorder %v689, 0.0
    %vm698 = vcmp.ge.f32.partialorder %v690, 0.0
    %v699 = vmul.f32 %v683, 0.1
    %v700 = vmul.f32 %v684, 0.1
    %v701 = vmul.f32 %v685, 0.1
    %v702 = vmul.f32 %v686, 0.1
    %v703 = vmul.f32 %v687, 0.1
    %v704 = vmul.f32 %v688, 0.1
    %v705 = vmul.f32 %v689, 0.1
    %v706 = vmul.f32 %v690, 0.1
    %v707 = vsel %vm691, %v683, %v699
    %v708 = vsel %vm692, %v684, %v700
    %v709 = vsel %vm693, %v685, %v701
    %v710 = vsel %vm694, %v686, %v702
    %v711 = vsel %vm695, %v687, %v703
    %v712 = vsel %vm696, %v688, %v704
    %v713 = vsel %vm697, %v689, %v705
    %v714 = vsel %vm698, %v690, %v706
    %v715 = vpack.c.bf16 %v707, %v707
    %v716 = vpack.c.bf16 %v708, %v708
    %v717 = vpack.c.bf16 %v709, %v709
    %v718 = vpack.c.bf16 %v710, %v710
    %v719 = vpack.c.bf16 %v711, %v711
    %v720 = vpack.c.bf16 %v712, %v712
    %v721 = vpack.c.bf16 %v713, %v713
    %v722 = vpack.c.bf16 %v714, %v714
    %v723 = vld [vmem:[#allocation2] sm:$0xf]
    %v724 = vld [vmem:[#allocation2 + $0x4] sm:$0xf]
    %v725 = vld [vmem:[#allocation2 + $0x8] sm:$0xf]
    %v726 = vld [vmem:[#allocation2 + $0xc] sm:$0xf]
    %v727 = vld [vmem:[#allocation2 + $0x10] sm:$0xf]
    %v728 = vld [vmem:[#allocation2 + $0x14] sm:$0xf]
    %v729 = vld [vmem:[#allocation2 + $0x18] sm:$0xf]
    %v730 = vld [vmem:[#allocation2 + $0x1c] sm:$0xf]
    %v731 = vld [vmem:[#allocation2 + $0x20] sm:$0xf]
    %v732 = vld [vmem:[#allocation2 + $0x24] sm:$0xf]
    %v733 = vld [vmem:[#allocation2 + $0x28] sm:$0xf]
    %v734 = vld [vmem:[#allocation2 + $0x2c] sm:$0xf]
    %v735 = vld [vmem:[#allocation2 + $0x30] sm:$0xf]
    %v736 = vld [vmem:[#allocation2 + $0x34] sm:$0xf]
    %v737 = vld [vmem:[#allocation2 + $0x38] sm:$0xf]
    %v738 = vld [vmem:[#allocation2 + $0x3c] sm:$0xf]
    %v739 = vld [vmem:[#allocation2 + $0x40] sm:$0xf]
    %v740 = vld [vmem:[#allocation2 + $0x44] sm:$0xf]
    %v741 = vld [vmem:[#allocation2 + $0x48] sm:$0xf]
    %v742 = vld [vmem:[#allocation2 + $0x4c] sm:$0xf]
    %v743 = vld [vmem:[#allocation2 + $0x50] sm:$0xf]
    %v744 = vld [vmem:[#allocation2 + $0x54] sm:$0xf]
    %v745 = vld [vmem:[#allocation2 + $0x58] sm:$0xf]
    %v746 = vld [vmem:[#allocation2 + $0x5c] sm:$0xf]
    %v747 = vld [vmem:[#allocation2 + $0x60] sm:$0xf]
    %v748 = vld [vmem:[#allocation2 + $0x64] sm:$0xf]
    %v749 = vld [vmem:[#allocation2 + $0x68] sm:$0xf]
    %v750 = vld [vmem:[#allocation2 + $0x6c] sm:$0xf]
    %v751 = vld [vmem:[#allocation2 + $0x70] sm:$0xf]
    %v752 = vld [vmem:[#allocation2 + $0x74] sm:$0xf]
    %v753 = vld [vmem:[#allocation2 + $0x78] sm:$0xf]
    %v754 = vld [vmem:[#allocation2 + $0x7c] sm:$0xf]
    %v755 = vld [vmem:[#allocation2 + $0x80] sm:$0xf]
    %v756 = vld [vmem:[#allocation2 + $0x84] sm:$0xf]
    %v757 = vld [vmem:[#allocation2 + $0x88] sm:$0xf]
    %v758 = vld [vmem:[#allocation2 + $0x8c] sm:$0xf]
    %v759 = vld [vmem:[#allocation2 + $0x90] sm:$0xf]
    %v760 = vld [vmem:[#allocation2 + $0x94] sm:$0xf]
    %v761 = vld [vmem:[#allocation2 + $0x98] sm:$0xf]
    %v762 = vld [vmem:[#allocation2 + $0x9c] sm:$0xf]
    %v763 = vld [vmem:[#allocation2 + $0xa0] sm:$0xf]
    %v764 = vld [vmem:[#allocation2 + $0xa4] sm:$0xf]
    %v765 = vld [vmem:[#allocation2 + $0xa8] sm:$0xf]
    %v766 = vld [vmem:[#allocation2 + $0xac] sm:$0xf]
    %v767 = vld [vmem:[#allocation2 + $0xb0] sm:$0xf]
    %v768 = vld [vmem:[#allocation2 + $0xb4] sm:$0xf]
    %v769 = vld [vmem:[#allocation2 + $0xb8] sm:$0xf]
    %v770 = vld [vmem:[#allocation2 + $0xbc] sm:$0xf]
    %v771 = vld [vmem:[#allocation2 + $0xc0] sm:$0xf]
    %v772 = vld [vmem:[#allocation2 + $0xc4] sm:$0xf]
    %v773 = vld [vmem:[#allocation2 + $0xc8] sm:$0xf]
    %v774 = vld [vmem:[#allocation2 + $0xcc] sm:$0xf]
    %v775 = vld [vmem:[#allocation2 + $0xd0] sm:$0xf]
    %v776 = vld [vmem:[#allocation2 + $0xd4] sm:$0xf]
    %v777 = vld [vmem:[#allocation2 + $0xd8] sm:$0xf]
    %v778 = vld [vmem:[#allocation2 + $0xdc] sm:$0xf]
    %v779 = vld [vmem:[#allocation2 + $0xe0] sm:$0xf]
    %v780 = vld [vmem:[#allocation2 + $0xe4] sm:$0xf]
    %v781 = vld [vmem:[#allocation2 + $0xe8] sm:$0xf]
    %v782 = vld [vmem:[#allocation2 + $0xec] sm:$0xf]
    %v783 = vld [vmem:[#allocation2 + $0xf0] sm:$0xf]
    %v784 = vld [vmem:[#allocation2 + $0xf4] sm:$0xf]
    %v785 = vld [vmem:[#allocation2 + $0xf8] sm:$0xf]
    %v786 = vld [vmem:[#allocation2 + $0xfc] sm:$0xf]
    %v787 = vld [vmem:[#allocation2 + $0x100] sm:$0xf]
    %v788 = vld [vmem:[#allocation2 + $0x104] sm:$0xf]
    %v789 = vld [vmem:[#allocation2 + $0x108] sm:$0xf]
    %v790 = vld [vmem:[#allocation2 + $0x10c] sm:$0xf]
    %v791 = vld [vmem:[#allocation2 + $0x110] sm:$0xf]
    %v792 = vld [vmem:[#allocation2 + $0x114] sm:$0xf]
    %v793 = vld [vmem:[#allocation2 + $0x118] sm:$0xf]
    %v794 = vld [vmem:[#allocation2 + $0x11c] sm:$0xf]
    %v795 = vld [vmem:[#allocation2 + $0x120] sm:$0xf]
    %v796 = vld [vmem:[#allocation2 + $0x124] sm:$0xf]
    %v797 = vld [vmem:[#allocation2 + $0x128] sm:$0xf]
    %v798 = vld [vmem:[#allocation2 + $0x12c] sm:$0xf]
    %v799 = vld [vmem:[#allocation2 + $0x130] sm:$0xf]
    %v800 = vld [vmem:[#allocation2 + $0x134] sm:$0xf]
    %v801 = vld [vmem:[#allocation2 + $0x138] sm:$0xf]
    %v802 = vld [vmem:[#allocation2 + $0x13c] sm:$0xf]
    %v803 = vld [vmem:[#allocation2 + $0x140] sm:$0xf]
    %v804 = vld [vmem:[#allocation2 + $0x144] sm:$0xf]
    %v805 = vld [vmem:[#allocation2 + $0x148] sm:$0xf]
    %v806 = vld [vmem:[#allocation2 + $0x14c] sm:$0xf]
    %v807 = vld [vmem:[#allocation2 + $0x150] sm:$0xf]
    %v808 = vld [vmem:[#allocation2 + $0x154] sm:$0xf]
    %v809 = vld [vmem:[#allocation2 + $0x158] sm:$0xf]
    %v810 = vld [vmem:[#allocation2 + $0x15c] sm:$0xf]
    %v811 = vld [vmem:[#allocation2 + $0x160] sm:$0xf]
    %v812 = vld [vmem:[#allocation2 + $0x164] sm:$0xf]
    %v813 = vld [vmem:[#allocation2 + $0x168] sm:$0xf]
    %v814 = vld [vmem:[#allocation2 + $0x16c] sm:$0xf]
    %v815 = vld [vmem:[#allocation2 + $0x170] sm:$0xf]
    %v816 = vld [vmem:[#allocation2 + $0x174] sm:$0xf]
    %v817 = vld [vmem:[#allocation2 + $0x178] sm:$0xf]
    %v818 = vld [vmem:[#allocation2 + $0x17c] sm:$0xf]
    %v819 = vld [vmem:[#allocation2 + $0x180] sm:$0xf]
    %v820 = vld [vmem:[#allocation2 + $0x184] sm:$0xf]
    %v821 = vld [vmem:[#allocation2 + $0x188] sm:$0xf]
    %v822 = vld [vmem:[#allocation2 + $0x18c] sm:$0xf]
    %v823 = vld [vmem:[#allocation2 + $0x190] sm:$0xf]
    %v824 = vld [vmem:[#allocation2 + $0x194] sm:$0xf]
    %v825 = vld [vmem:[#allocation2 + $0x198] sm:$0xf]
    %v826 = vld [vmem:[#allocation2 + $0x19c] sm:$0xf]
    %v827 = vld [vmem:[#allocation2 + $0x1a0] sm:$0xf]
    %v828 = vld [vmem:[#allocation2 + $0x1a4] sm:$0xf]
    %v829 = vld [vmem:[#allocation2 + $0x1a8] sm:$0xf]
    %v830 = vld [vmem:[#allocation2 + $0x1ac] sm:$0xf]
    %v831 = vld [vmem:[#allocation2 + $0x1b0] sm:$0xf]
    %v832 = vld [vmem:[#allocation2 + $0x1b4] sm:$0xf]
    %v833 = vld [vmem:[#allocation2 + $0x1b8] sm:$0xf]
    %v834 = vld [vmem:[#allocation2 + $0x1bc] sm:$0xf]
    %v835 = vld [vmem:[#allocation2 + $0x1c0] sm:$0xf]
    %v836 = vld [vmem:[#allocation2 + $0x1c4] sm:$0xf]
    %v837 = vld [vmem:[#allocation2 + $0x1c8] sm:$0xf]
    %v838 = vld [vmem:[#allocation2 + $0x1cc] sm:$0xf]
    %v839 = vld [vmem:[#allocation2 + $0x1d0] sm:$0xf]
    %v840 = vld [vmem:[#allocation2 + $0x1d4] sm:$0xf]
    %v841 = vld [vmem:[#allocation2 + $0x1d8] sm:$0xf]
    %v842 = vld [vmem:[#allocation2 + $0x1dc] sm:$0xf]
    %v843 = vld [vmem:[#allocation2 + $0x1e0] sm:$0xf]
    %v844 = vld [vmem:[#allocation2 + $0x1e4] sm:$0xf]
    %v845 = vld [vmem:[#allocation2 + $0x1e8] sm:$0xf]
    %v846 = vld [vmem:[#allocation2 + $0x1ec] sm:$0xf]
    %v847 = vld [vmem:[#allocation2 + $0x1f0] sm:$0xf]
    %v848 = vld [vmem:[#allocation2 + $0x1f4] sm:$0xf]
    %v849 = vld [vmem:[#allocation2 + $0x1f8] sm:$0xf]
    %v850 = vld [vmem:[#allocation2 + $0x1fc] sm:$0xf]
    %v979 = vunpack.c.l.b16 %v723
    %v980 = vunpack.c.l.b16 %v724
    %v981 = vunpack.c.l.b16 %v725
    %v982 = vunpack.c.l.b16 %v726
    %v983 = vunpack.c.l.b16 %v727
    %v984 = vunpack.c.l.b16 %v728
    %v985 = vunpack.c.l.b16 %v729
    %v986 = vunpack.c.l.b16 %v730
    %v987 = vunpack.c.l.b16 %v731
    %v988 = vunpack.c.l.b16 %v732
    %v989 = vunpack.c.l.b16 %v733
    %v990 = vunpack.c.l.b16 %v734
    %v991 = vunpack.c.l.b16 %v735
    %v992 = vunpack.c.l.b16 %v736
    %v993 = vunpack.c.l.b16 %v737
    %v994 = vunpack.c.l.b16 %v738
    %v995 = vunpack.c.l.b16 %v739
    %v996 = vunpack.c.l.b16 %v740
    %v997 = vunpack.c.l.b16 %v741
    %v998 = vunpack.c.l.b16 %v742
    %v999 = vunpack.c.l.b16 %v743
    %v1000 = vunpack.c.l.b16 %v744
    %v1001 = vunpack.c.l.b16 %v745
    %v1002 = vunpack.c.l.b16 %v746
    %v1003 = vunpack.c.l.b16 %v747
    %v1004 = vunpack.c.l.b16 %v748
    %v1005 = vunpack.c.l.b16 %v749
    %v1006 = vunpack.c.l.b16 %v750
    %v1007 = vunpack.c.l.b16 %v751
    %v1008 = vunpack.c.l.b16 %v752
    %v1009 = vunpack.c.l.b16 %v753
    %v1010 = vunpack.c.l.b16 %v754
    %v1011 = vunpack.c.l.b16 %v755
    %v1012 = vunpack.c.l.b16 %v756
    %v1013 = vunpack.c.l.b16 %v757
    %v1014 = vunpack.c.l.b16 %v758
    %v1015 = vunpack.c.l.b16 %v759
    %v1016 = vunpack.c.l.b16 %v760
    %v1017 = vunpack.c.l.b16 %v761
    %v1018 = vunpack.c.l.b16 %v762
    %v1019 = vunpack.c.l.b16 %v763
    %v1020 = vunpack.c.l.b16 %v764
    %v1021 = vunpack.c.l.b16 %v765
    %v1022 = vunpack.c.l.b16 %v766
    %v1023 = vunpack.c.l.b16 %v767
    %v1024 = vunpack.c.l.b16 %v768
    %v1025 = vunpack.c.l.b16 %v769
    %v1026 = vunpack.c.l.b16 %v770
    %v1027 = vunpack.c.l.b16 %v771
    %v1028 = vunpack.c.l.b16 %v772
    %v1029 = vunpack.c.l.b16 %v773
    %v1030 = vunpack.c.l.b16 %v774
    %v1031 = vunpack.c.l.b16 %v775
    %v1032 = vunpack.c.l.b16 %v776
    %v1033 = vunpack.c.l.b16 %v777
    %v1034 = vunpack.c.l.b16 %v778
    %v1035 = vunpack.c.l.b16 %v779
    %v1036 = vunpack.c.l.b16 %v780
    %v1037 = vunpack.c.l.b16 %v781
    %v1038 = vunpack.c.l.b16 %v782
    %v1039 = vunpack.c.l.b16 %v783
    %v1040 = vunpack.c.l.b16 %v784
    %v1041 = vunpack.c.l.b16 %v785
    %v1042 = vunpack.c.l.b16 %v786
    %v1043 = vunpack.c.l.b16 %v787
    %v1044 = vunpack.c.l.b16 %v788
    %v1045 = vunpack.c.l.b16 %v789
    %v1046 = vunpack.c.l.b16 %v790
    %v1047 = vunpack.c.l.b16 %v791
    %v1048 = vunpack.c.l.b16 %v792
    %v1049 = vunpack.c.l.b16 %v793
    %v1050 = vunpack.c.l.b16 %v794
    %v1051 = vunpack.c.l.b16 %v795
    %v1052 = vunpack.c.l.b16 %v796
    %v1053 = vunpack.c.l.b16 %v797
    %v1054 = vunpack.c.l.b16 %v798
    %v1055 = vunpack.c.l.b16 %v799
    %v1056 = vunpack.c.l.b16 %v800
    %v1057 = vunpack.c.l.b16 %v801
    %v1058 = vunpack.c.l.b16 %v802
    %v1059 = vunpack.c.l.b16 %v803
    %v1060 = vunpack.c.l.b16 %v804
    %v1061 = vunpack.c.l.b16 %v805
    %v1062 = vunpack.c.l.b16 %v806
    %v1063 = vunpack.c.l.b16 %v807
    %v1064 = vunpack.c.l.b16 %v808
    %v1065 = vunpack.c.l.b16 %v809
    %v1066 = vunpack.c.l.b16 %v810
    %v1067 = vunpack.c.l.b16 %v811
    %v1068 = vunpack.c.l.b16 %v812
    %v1069 = vunpack.c.l.b16 %v813
    %v1070 = vunpack.c.l.b16 %v814
    %v1071 = vunpack.c.l.b16 %v815
    %v1072 = vunpack.c.l.b16 %v816
    %v1073 = vunpack.c.l.b16 %v817
    %v1074 = vunpack.c.l.b16 %v818
    %v1075 = vunpack.c.l.b16 %v819
    %v1076 = vunpack.c.l.b16 %v820
    %v1077 = vunpack.c.l.b16 %v821
    %v1078 = vunpack.c.l.b16 %v822
    %v1079 = vunpack.c.l.b16 %v823
    %v1080 = vunpack.c.l.b16 %v824
    %v1081 = vunpack.c.l.b16 %v825
    %v1082 = vunpack.c.l.b16 %v826
    %v1083 = vunpack.c.l.b16 %v827
    %v1084 = vunpack.c.l.b16 %v828
    %v1085 = vunpack.c.l.b16 %v829
    %v1086 = vunpack.c.l.b16 %v830
    %v1087 = vunpack.c.l.b16 %v831
    %v1088 = vunpack.c.l.b16 %v832
    %v1089 = vunpack.c.l.b16 %v833
    %v1090 = vunpack.c.l.b16 %v834
    %v1091 = vunpack.c.l.b16 %v835
    %v1092 = vunpack.c.l.b16 %v836
    %v1093 = vunpack.c.l.b16 %v837
    %v1094 = vunpack.c.l.b16 %v838
    %v1095 = vunpack.c.l.b16 %v839
    %v1096 = vunpack.c.l.b16 %v840
    %v1097 = vunpack.c.l.b16 %v841
    %v1098 = vunpack.c.l.b16 %v842
    %v1099 = vunpack.c.l.b16 %v843
    %v1100 = vunpack.c.l.b16 %v844
    %v1101 = vunpack.c.l.b16 %v845
    %v1102 = vunpack.c.l.b16 %v846
    %v1103 = vunpack.c.l.b16 %v847
    %v1104 = vunpack.c.l.b16 %v848
    %v1105 = vunpack.c.l.b16 %v849
    %v1106 = vunpack.c.l.b16 %v850
    %v1107 = vpack.c.b16 %v980, %v979
    %v1108 = vpack.c.b16 %v982, %v981
    %v1109 = vpack.c.b16 %v984, %v983
    %v1110 = vpack.c.b16 %v986, %v985
    %v1111 = vpack.c.b16 %v988, %v987
    %v1112 = vpack.c.b16 %v990, %v989
    %v1113 = vpack.c.b16 %v992, %v991
    %v1114 = vpack.c.b16 %v994, %v993
    %v1115 = vpack.c.b16 %v996, %v995
    %v1116 = vpack.c.b16 %v998, %v997
    %v1117 = vpack.c.b16 %v1000, %v999
    %v1118 = vpack.c.b16 %v1002, %v1001
    %v1119 = vpack.c.b16 %v1004, %v1003
    %v1120 = vpack.c.b16 %v1006, %v1005
    %v1121 = vpack.c.b16 %v1008, %v1007
    %v1122 = vpack.c.b16 %v1010, %v1009
    %v1123 = vpack.c.b16 %v1012, %v1011
    %v1124 = vpack.c.b16 %v1014, %v1013
    %v1125 = vpack.c.b16 %v1016, %v1015
    %v1126 = vpack.c.b16 %v1018, %v1017
    %v1127 = vpack.c.b16 %v1020, %v1019
    %v1128 = vpack.c.b16 %v1022, %v1021
    %v1129 = vpack.c.b16 %v1024, %v1023
    %v1130 = vpack.c.b16 %v1026, %v1025
    %v1131 = vpack.c.b16 %v1028, %v1027
    %v1132 = vpack.c.b16 %v1030, %v1029
    %v1133 = vpack.c.b16 %v1032, %v1031
    %v1134 = vpack.c.b16 %v1034, %v1033
    %v1135 = vpack.c.b16 %v1036, %v1035
    %v1136 = vpack.c.b16 %v1038, %v1037
    %v1137 = vpack.c.b16 %v1040, %v1039
    %v1138 = vpack.c.b16 %v1042, %v1041
    %v1139 = vpack.c.b16 %v1044, %v1043
    %v1140 = vpack.c.b16 %v1046, %v1045
    %v1141 = vpack.c.b16 %v1048, %v1047
    %v1142 = vpack.c.b16 %v1050, %v1049
    %v1143 = vpack.c.b16 %v1052, %v1051
    %v1144 = vpack.c.b16 %v1054, %v1053
    %v1145 = vpack.c.b16 %v1056, %v1055
    %v1146 = vpack.c.b16 %v1058, %v1057
    %v1147 = vpack.c.b16 %v1060, %v1059
    %v1148 = vpack.c.b16 %v1062, %v1061
    %v1149 = vpack.c.b16 %v1064, %v1063
    %v1150 = vpack.c.b16 %v1066, %v1065
    %v1151 = vpack.c.b16 %v1068, %v1067
    %v1152 = vpack.c.b16 %v1070, %v1069
    %v1153 = vpack.c.b16 %v1072, %v1071
    %v1154 = vpack.c.b16 %v1074, %v1073
    %v1155 = vpack.c.b16 %v1076, %v1075
    %v1156 = vpack.c.b16 %v1078, %v1077
    %v1157 = vpack.c.b16 %v1080, %v1079
    %v1158 = vpack.c.b16 %v1082, %v1081
    %v1159 = vpack.c.b16 %v1084, %v1083
    %v1160 = vpack.c.b16 %v1086, %v1085
    %v1161 = vpack.c.b16 %v1088, %v1087
    %v1162 = vpack.c.b16 %v1090, %v1089
    %v1163 = vpack.c.b16 %v1092, %v1091
    %v1164 = vpack.c.b16 %v1094, %v1093
    %v1165 = vpack.c.b16 %v1096, %v1095
    %v1166 = vpack.c.b16 %v1098, %v1097
    %v1167 = vpack.c.b16 %v1100, %v1099
    %v1168 = vpack.c.b16 %v1102, %v1101
    %v1169 = vpack.c.b16 %v1104, %v1103
    %v1170 = vpack.c.b16 %v1106, %v1105
    %1235 = vmatprep.subr.bf16.mxu0 0
    %1236 = vmatpush1.bf16.msra.mxu0 %v1107
    %1237 = vmatprep.subr.bf16.mxu0 0
    %1238 = vmatpush1.bf16.msra.mxu0 %v1108
    %1239 = vmatprep.subr.bf16.mxu0 0
    %1240 = vmatpush1.bf16.msra.mxu0 %v1109
    %1241 = vmatprep.subr.bf16.mxu0 0
    %1242 = vmatpush1.bf16.msra.mxu0 %v1110
    %1243 = vmatprep.subr.bf16.mxu0 0
    %1244 = vmatpush1.bf16.msra.mxu0 %v1111
    %1245 = vmatprep.subr.bf16.mxu0 0
    %1246 = vmatpush1.bf16.msra.mxu0 %v1112
    %1247 = vmatprep.subr.bf16.mxu0 0
    %1248 = vmatpush1.bf16.msra.mxu0 %v1113
    %1249 = vmatprep.subr.bf16.mxu0 0
    %1250 = vmatpush1.bf16.msra.mxu0 %v1114
    %1251 = vmatprep.subr.bf16.mxu0 0
    %1252 = vmatpush1.bf16.msra.mxu0 %v1115
    %1253 = vmatprep.subr.bf16.mxu0 0
    %1254 = vmatpush1.bf16.msra.mxu0 %v1116
    %1255 = vmatprep.subr.bf16.mxu0 0
    %1256 = vmatpush1.bf16.msra.mxu0 %v1117
    %1257 = vmatprep.subr.bf16.mxu0 0
    %1258 = vmatpush1.bf16.msra.mxu0 %v1118
    %1259 = vmatprep.subr.bf16.mxu0 0
    %1260 = vmatpush1.bf16.msra.mxu0 %v1119
    %1261 = vmatprep.subr.bf16.mxu0 0
    %1262 = vmatpush1.bf16.msra.mxu0 %v1120
    %1263 = vmatprep.subr.bf16.mxu0 0
    %1264 = vmatpush1.bf16.msra.mxu0 %v1121
    %1265 = vmatprep.subr.bf16.mxu0 0
    %1266 = vmatpush1.bf16.msra.mxu0 %v1122
    %1267 = vmatprep.mubr.bf16.mxu0 %v716
    %1268 = vmatmul.mubr.bf16.gmra.mrb[0].mxu0 %v715
    %v1269 = vpop.f32.mrb[0].mxu0
    %v1270 = vadd.f32 0.0, %v1269
    %v1271 = vpop.f32.mrb[0].mxu0
    %v1272 = vpop.f32.mrb[0].mxu0
    %v1273 = vpop.f32.mrb[0].mxu0
    %1274 = vdwg.mxu0
    %1275 = vmatprep.subr.bf16.mxu0 0
    %1276 = vmatpush1.bf16.msra.mxu0 %v1123
    %1277 = vmatprep.subr.bf16.mxu0 0
    %1278 = vmatpush1.bf16.msra.mxu0 %v1124
    %1279 = vmatprep.subr.bf16.mxu0 0
    %1280 = vmatpush1.bf16.msra.mxu0 %v1125
    %1281 = vmatprep.subr.bf16.mxu0 0
    %1282 = vmatpush1.bf16.msra.mxu0 %v1126
    %1283 = vmatprep.subr.bf16.mxu0 0
    %1284 = vmatpush1.bf16.msra.mxu0 %v1127
    %1285 = vmatprep.subr.bf16.mxu0 0
    %1286 = vmatpush1.bf16.msra.mxu0 %v1128
    %1287 = vmatprep.subr.bf16.mxu0 0
    %1288 = vmatpush1.bf16.msra.mxu0 %v1129
    %1289 = vmatprep.subr.bf16.mxu0 0
    %1290 = vmatpush1.bf16.msra.mxu0 %v1130
    %1291 = vmatprep.subr.bf16.mxu0 0
    %1292 = vmatpush1.bf16.msra.mxu0 %v1131
    %1293 = vmatprep.subr.bf16.mxu0 0
    %1294 = vmatpush1.bf16.msra.mxu0 %v1132
    %1295 = vmatprep.subr.bf16.mxu0 0
    %1296 = vmatpush1.bf16.msra.mxu0 %v1133
    %1297 = vmatprep.subr.bf16.mxu0 0
    %1298 = vmatpush1.bf16.msra.mxu0 %v1134
    %1299 = vmatprep.subr.bf16.mxu0 0
    %1300 = vmatpush1.bf16.msra.mxu0 %v1135
    %1301 = vmatprep.subr.bf16.mxu0 0
    %1302 = vmatpush1.bf16.msra.mxu0 %v1136
    %1303 = vmatprep.subr.bf16.mxu0 0
    %1304 = vmatpush1.bf16.msra.mxu0 %v1137
    %1305 = vmatprep.subr.bf16.mxu0 0
    %1306 = vmatpush1.bf16.msra.mxu0 %v1138
    %1307 = vmatprep.mubr.bf16.mxu0 %v718
    %1308 = vmatmul.mubr.bf16.gmra.mrb[0].mxu0 %v717
    %v1309 = vpop.f32.mrb[0].mxu0
    %v1310 = vadd.f32 %v1270, %v1309
    %v1311 = vpop.f32.mrb[0].mxu0
    %v1312 = vpop.f32.mrb[0].mxu0
    %v1313 = vpop.f32.mrb[0].mxu0
    %1314 = vdwg.mxu0
    %1315 = vmatprep.subr.bf16.mxu0 0
    %1316 = vmatpush1.bf16.msra.mxu0 %v1139
    %1317 = vmatprep.subr.bf16.mxu0 0
    %1318 = vmatpush1.bf16.msra.mxu0 %v1140
    %1319 = vmatprep.subr.bf16.mxu0 0
    %1320 = vmatpush1.bf16.msra.mxu0 %v1141
    %1321 = vmatprep.subr.bf16.mxu0 0
    %1322 = vmatpush1.bf16.msra.mxu0 %v1142
    %1323 = vmatprep.subr.bf16.mxu0 0
    %1324 = vmatpush1.bf16.msra.mxu0 %v1143
    %1325 = vmatprep.subr.bf16.mxu0 0
    %1326 = vmatpush1.bf16.msra.mxu0 %v1144
    %1327 = vmatprep.subr.bf16.mxu0 0
    %1328 = vmatpush1.bf16.msra.mxu0 %v1145
    %1329 = vmatprep.subr.bf16.mxu0 0
    %1330 = vmatpush1.bf16.msra.mxu0 %v1146
    %1331 = vmatprep.subr.bf16.mxu0 0
    %1332 = vmatpush1.bf16.msra.mxu0 %v1147
    %1333 = vmatprep.subr.bf16.mxu0 0
    %1334 = vmatpush1.bf16.msra.mxu0 %v1148
    %1335 = vmatprep.subr.bf16.mxu0 0
    %1336 = vmatpush1.bf16.msra.mxu0 %v1149
    %1337 = vmatprep.subr.bf16.mxu0 0
    %1338 = vmatpush1.bf16.msra.mxu0 %v1150
    %1339 = vmatprep.subr.bf16.mxu0 0
    %1340 = vmatpush1.bf16.msra.mxu0 %v1151
    %1341 = vmatprep.subr.bf16.mxu0 0
    %1342 = vmatpush1.bf16.msra.mxu0 %v1152
    %1343 = vmatprep.subr.bf16.mxu0 0
    %1344 = vmatpush1.bf16.msra.mxu0 %v1153
    %1345 = vmatprep.subr.bf16.mxu0 0
    %1346 = vmatpush1.bf16.msra.mxu0 %v1154
    %1347 = vmatprep.mubr.bf16.mxu0 %v720
    %1348 = vmatmul.mubr.bf16.gmra.mrb[0].mxu0 %v719
    %v1349 = vpop.f32.mrb[0].mxu0
    %v1350 = vadd.f32 %v1310, %v1349
    %v1351 = vpop.f32.mrb[0].mxu0
    %v1352 = vpop.f32.mrb[0].mxu0
    %v1353 = vpop.f32.mrb[0].mxu0
    %1354 = vdwg.mxu0
    %1355 = vmatprep.subr.bf16.mxu0 0
    %1356 = vmatpush1.bf16.msra.mxu0 %v1155
    %1357 = vmatprep.subr.bf16.mxu0 0
    %1358 = vmatpush1.bf16.msra.mxu0 %v1156
    %1359 = vmatprep.subr.bf16.mxu0 0
    %1360 = vmatpush1.bf16.msra.mxu0 %v1157
    %1361 = vmatprep.subr.bf16.mxu0 0
    %1362 = vmatpush1.bf16.msra.mxu0 %v1158
    %1363 = vmatprep.subr.bf16.mxu0 0
    %1364 = vmatpush1.bf16.msra.mxu0 %v1159
    %1365 = vmatprep.subr.bf16.mxu0 0
    %1366 = vmatpush1.bf16.msra.mxu0 %v1160
    %1367 = vmatprep.subr.bf16.mxu0 0
    %1368 = vmatpush1.bf16.msra.mxu0 %v1161
    %1369 = vmatprep.subr.bf16.mxu0 0
    %1370 = vmatpush1.bf16.msra.mxu0 %v1162
    %1371 = vmatprep.subr.bf16.mxu0 0
    %1372 = vmatpush1.bf16.msra.mxu0 %v1163
    %1373 = vmatprep.subr.bf16.mxu0 0
    %1374 = vmatpush1.bf16.msra.mxu0 %v1164
    %1375 = vmatprep.subr.bf16.mxu0 0
    %1376 = vmatpush1.bf16.msra.mxu0 %v1165
    %1377 = vmatprep.subr.bf16.mxu0 0
    %1378 = vmatpush1.bf16.msra.mxu0 %v1166
    %1379 = vmatprep.subr.bf16.mxu0 0
    %1380 = vmatpush1.bf16.msra.mxu0 %v1167
    %1381 = vmatprep.subr.bf16.mxu0 0
    %1382 = vmatpush1.bf16.msra.mxu0 %v1168
    %1383 = vmatprep.subr.bf16.mxu0 0
    %1384 = vmatpush1.bf16.msra.mxu0 %v1169
    %1385 = vmatprep.subr.bf16.mxu0 0
    %1386 = vmatpush1.bf16.msra.mxu0 %v1170
    %1387 = vmatprep.mubr.bf16.mxu0 %v722
    %1388 = vmatmul.mubr.bf16.gmra.mrb[0].mxu0 %v721
    %v1389 = vpop.f32.mrb[0].mxu0
    %v1390 = vadd.f32 %v1350, %v1389
    %v1391 = vpop.f32.mrb[0].mxu0
    %v1392 = vpop.f32.mrb[0].mxu0
    %v1393 = vpop.f32.mrb[0].mxu0
    %1394 = vdwg.mxu0
    %1395 = vst [vmem:[%s6] sm:$0xff] %v1390
    %v1396 = vmul.f32 %v1390, %v1390
    %1397 = vadd.xlane.f32.xlu0 %v1396
    %v1398 = vpop.xlane.xlu0 %1397
    %v1399 = vmax.f32 %v1398, 1e-24
    %v1400 = vrsqrt.pop %v1399
    %v1401 = vmul.f32 %v1390, %v1400
    %v1402 = vpack.c.bf16 %v1401, %v1401
    %v1403 = vld [vmem:[%s5] sm:$0xf]
    %v1404 = vld [vmem:[%s5 + $0x4] sm:$0xf]
    %v1405 = vld [vmem:[%s5 + $0x8] sm:$0xf]
    %v1406 = vld [vmem:[%s5 + $0xc] sm:$0xf]
    %v1407 = vld [vmem:[%s5 + $0x10] sm:$0xf]
    %v1408 = vld [vmem:[%s5 + $0x14] sm:$0xf]
    %v1409 = vld [vmem:[%s5 + $0x18] sm:$0xf]
    %v1410 = vld [vmem:[%s5 + $0x1c] sm:$0xf]
    %v1411 = vld [vmem:[%s5 + $0x20] sm:$0xf]
    %v1412 = vld [vmem:[%s5 + $0x24] sm:$0xf]
    %v1413 = vld [vmem:[%s5 + $0x28] sm:$0xf]
    %v1414 = vld [vmem:[%s5 + $0x2c] sm:$0xf]
    %v1415 = vld [vmem:[%s5 + $0x30] sm:$0xf]
    %v1416 = vld [vmem:[%s5 + $0x34] sm:$0xf]
    %v1417 = vld [vmem:[%s5 + $0x38] sm:$0xf]
    %v1418 = vld [vmem:[%s5 + $0x3c] sm:$0xf]
    %v1435 = vunpack.c.l.b16 %v1403
    %v1436 = vunpack.c.l.b16 %v1404
    %v1437 = vunpack.c.l.b16 %v1405
    %v1438 = vunpack.c.l.b16 %v1406
    %v1439 = vunpack.c.l.b16 %v1407
    %v1440 = vunpack.c.l.b16 %v1408
    %v1441 = vunpack.c.l.b16 %v1409
    %v1442 = vunpack.c.l.b16 %v1410
    %v1443 = vunpack.c.l.b16 %v1411
    %v1444 = vunpack.c.l.b16 %v1412
    %v1445 = vunpack.c.l.b16 %v1413
    %v1446 = vunpack.c.l.b16 %v1414
    %v1447 = vunpack.c.l.b16 %v1415
    %v1448 = vunpack.c.l.b16 %v1416
    %v1449 = vunpack.c.l.b16 %v1417
    %v1450 = vunpack.c.l.b16 %v1418
    %v1451 = vpack.c.b16 %v1436, %v1435
    %v1452 = vpack.c.b16 %v1438, %v1437
    %v1453 = vpack.c.b16 %v1440, %v1439
    %v1454 = vpack.c.b16 %v1442, %v1441
    %v1455 = vpack.c.b16 %v1444, %v1443
    %v1456 = vpack.c.b16 %v1446, %v1445
    %v1457 = vpack.c.b16 %v1448, %v1447
    %v1458 = vpack.c.b16 %v1450, %v1449
    %1467 = vmatprep.subr.bf16.mxu0 0
    %1468 = vmatpush1.bf16.msra.mxu0 %v1451
    %1469 = vmatprep.subr.bf16.mxu0 0
    %1470 = vmatpush1.bf16.msra.mxu0 %v1452
    %1471 = vmatprep.subr.bf16.mxu0 0
    %1472 = vmatpush1.bf16.msra.mxu0 %v1453
    %1473 = vmatprep.subr.bf16.mxu0 0
    %1474 = vmatpush1.bf16.msra.mxu0 %v1454
    %1475 = vmatprep.subr.bf16.mxu0 0
    %1476 = vmatpush1.bf16.msra.mxu0 %v1455
    %1477 = vmatprep.subr.bf16.mxu0 0
    %1478 = vmatpush1.bf16.msra.mxu0 %v1456
    %1479 = vmatprep.subr.bf16.mxu0 0
    %1480 = vmatpush1.bf16.msra.mxu0 %v1457
    %1481 = vmatprep.subr.bf16.mxu0 0
    %1482 = vmatpush1.bf16.msra.mxu0 %v1458
    %1483 = vmatprep.subr.bf16.mxu0 0
    %1484 = vmatpush1.bf16.msra.mxu0 0
    %1485 = vmatprep.subr.bf16.mxu0 0
    %1486 = vmatpush1.bf16.msra.mxu0 0
    %1487 = vmatprep.subr.bf16.mxu0 0
    %1488 = vmatpush1.bf16.msra.mxu0 0
    %1489 = vmatprep.subr.bf16.mxu0 0
    %1490 = vmatpush1.bf16.msra.mxu0 0
    %1491 = vmatprep.subr.bf16.mxu0 0
    %1492 = vmatpush1.bf16.msra.mxu0 0
    %1493 = vmatprep.subr.bf16.mxu0 0
    %1494 = vmatpush1.bf16.msra.mxu0 0
    %1495 = vmatprep.subr.bf16.mxu0 0
    %1496 = vmatpush1.bf16.msra.mxu0 0
    %1497 = vmatprep.subr.bf16.mxu0 0
    %1498 = vmatpush1.bf16.msra.mxu0 0
    %1499 = vmatprep.mubr.bf16.mxu0 0
    %1500 = vmatmul.mubr.bf16.gmra.mrb[0].mxu0 %v1402
    %v1501 = vpop.f32.mrb[0].mxu0
    %v1502 = vadd.f32 0.0, %v1501
    %v1503 = vpop.f32.mrb[0].mxu0
    %v1504 = vpop.f32.mrb[0].mxu0
    %v1505 = vpop.f32.mrb[0].mxu0
    %1506 = vdwg.mxu0
    %v1507 = vmul.f32 %v1502, %v1502
    %v1508 = vsub.f32 1.0, %v1507
    %v1509 = vmax.f32 %v1508, 0.0
    %v1510 = vrsqrt.pop %v1509
    %v1511 = vmul.f32 %v1509, %v1510
    %vm1512 = vcmp.eq.f32.partialorder %v1509, inf
    %v1513 = vsel %vm1512, %v1509, %v1511
    %vm1514 = vcmp.eq.f32.partialorder %v1509, 0.0
    %v1515 = vand.u32 %v1509, 2147483648
    %v1516 = vsel %vm1514, %v1515, %v1513
    %v1517 = vmul.f32 %v1502, 0.5403023
    %v1518 = vmul.f32 %v1516, 0.84147096
    %v1519 = vsub.f32 %v1517, %v1518
    %v1520 = vmul.f32 %v1519, 10.0
    %v1521 = vmul.f32 %v1520, 1.442695
    %v1522 = vpow.pop %v1521
    %v1523 = vmul.f32 %v1502, 10.0
    %v1524 = vmul.f32 %v1523, 1.442695
    %v1525 = vpow.pop %v1524
    %vm1526 = vcmp.lt.s32.totalorder %v149, 25
    %v1527 = vsel %vm1526, 1, 0
    %vm1528 = vcmp.eq.s32.totalorder %v1527, 1
    %v1529 = vsel %vm1528, %v1525, 0.0
    %1530 = vadd.xlane.f32.xlu0 %v1529
    %v1531 = vpop.xlane.xlu0 %1530
    %v1532 = vsub.f32 %v1531, %v1525
    %v1533 = vadd.f32 %v1532, %v1522
    %v1534 = vrcp.pop %v1533
    %v1535 = vmul.f32 %v1522, %v1534
    %1536 = vst [vmem:[%s7] sm:$0xff] %v1535
    // Predicated region
    $region30: #{facenet_forward.1} parent=1 // pred_check
      _
    $region31: #{facenet_forward.1} parent=1 // pred_check_branch
      %1538 = sbr.rel (0) target = $region33
    $region32: #{facenet_forward.1} parent=1 // pred_region
      _
    $region33: #{facenet_forward.1} parent=1 // pred_fallthru
      _
    // Predicated region
    $region34: #{facenet_forward.1} parent=1 // pred_check
      _
    $region35: #{facenet_forward.1} parent=1 // pred_check_branch
      %1540 = sbr.rel (0) target = $region37
    $region36: #{facenet_forward.1} parent=1 // pred_region
      _
    $region37: #{facenet_forward.1} parent=1 // pred_fallthru
      _
    // Predicated region
    $region38: #{facenet_forward.1} parent=1 // pred_check
      _
    $region39: #{facenet_forward.1} parent=1 // pred_check_branch
      %1542 = sbr.rel (0) target = $region41
    $region40: #{facenet_forward.1} parent=1 // pred_region
      _
    $region41: #{facenet_forward.1} parent=1 // pred_fallthru
      _
    // Predicated region
    $region42: #{facenet_forward.1} parent=1 // pred_check
      _
    $region43: #{facenet_forward.1} parent=1 // pred_check_branch
      %1544 = sbr.rel (0) target = $region45
    $region44: #{facenet_forward.1} parent=1 // pred_region
      _
    $region45: #{facenet_forward.1} parent=1 // pred_fallthru
      _
    %1545 = vsyncpa [#allocation3], 1

</llo_original>
